<compile_context>
chip_gen: v6e
topology: v6e:2x2x1
jax: 0.10.0
libtpu: 0.0.40
codegen_flags: <defaults>
</compile_context>

<pallas_src>
import functools

import jax
import jax.numpy as jnp
from jax.experimental import pallas as pl
from jax.experimental.pallas import tpu as pltpu


def _balanced_l1_kernel(*refs, normalize: bool, num_l: float, use_mxu: bool):
    if use_mxu:
        prob_ref, seg_ref, ones_ref, out_ref = refs
    else:
        prob_ref, seg_ref, out_ref = refs

    prob_raw = prob_ref[...]                      # (TR, L), native dtype
    seg_raw = seg_ref[...]
    prob = prob_raw.astype(jnp.float32)
    seg = seg_raw.astype(jnp.float32)

    if use_mxu:
        # Row sums on the (otherwise idle) MXU: every column of the result is
        # the same sum, keep column 0.  bf16 operands feed the MXU directly
        # (exact f32 accumulation); f32 operands request HIGHEST precision.
        ones = ones_ref[...]
        precision = (jax.lax.Precision.HIGHEST
                     if prob_raw.dtype == jnp.float32 else None)
        prob_sum = jnp.dot(prob_raw, ones, precision=precision,
                           preferred_element_type=jnp.float32)[:, 0]   # (TR,)
        seg_sum = jnp.dot(seg_raw, ones, precision=precision,
                          preferred_element_type=jnp.float32)[:, 0]    # (TR,)
    else:
        prob_sum = jnp.sum(prob, axis=1)                               # (TR,)
        seg_sum = jnp.sum(seg, axis=1)                                 # (TR,)

    # The elementwise product is needed anyway; keep its (exact f32) reduction
    # on the VPU in both paths.
    ps_sum = jnp.sum(prob * seg, axis=1)                               # (TR,)

    bg_num = prob_sum - ps_sum        # sum(prob * (1 - seg))
    obj_num = ps_sum                  # sum(prob * seg)

    if normalize:
        # Loss is linear in prob: scale the per-row sums instead of dividing
        # the whole (TR, L) tile.
        row_max = jnp.max(prob, axis=1)                                # (TR,)
        scale = 1.0 / (row_max + 1e-05)
        bg_num = bg_num * scale
        obj_num = obj_num * scale

    bg_den = (num_l - seg_sum) + 1e-05    # sum(1 - seg) + eps
    obj_den = seg_sum + 1e-05             # sum(seg) + eps

    loss = bg_num / bg_den - obj_num / obj_den                         # (TR,)
    out_ref[...] = loss[None, :].astype(out_ref.dtype)                 # (1, TR)


def _physical_vmem_bytes() -> int:
    """Best-effort physical VMEM query; conservative fallback (v7x = 64 MiB)."""
    try:
        info = pltpu.get_tpu_info()
        for name in ("vmem_capacity_bytes", "vmem_size_bytes", "vmem_bytes"):
            v = getattr(info, name, None)
            if v:
                return int(v)
    except Exception:
        pass
    return 64 << 20


def _choose_row_tile(rows: int, per_row_bytes: int, budget_bytes: int) -> int:
    """Rows per tile: as large as the VMEM budget allows, lane/sublane aligned."""
    max_tr = int(budget_bytes // max(per_row_bytes, 1))
    if max_tr >= rows:
        return rows
    if max_tr >= 128:
        return (max_tr // 128) * 128
    if max_tr >= 8:
        return (max_tr // 8) * 8
    # TODO(synk): L so large that even 8 rows exceed the budget needs an extra
    # "arbitrary" L reduction grid axis; clamp and hope the limit absorbs it.
    return min(8, rows)


def balanced_l1_loss(object_token_attn_prob,
                     object_segmaps,
                     *,
                     threshold: float = 1.0,
                     normalize: bool = False,
                     use_mxu_reduction=None):
    """JAX/Pallas equivalent of BalancedL1Loss.forward.

    Args:
      object_token_attn_prob: (B, N, L) float array (float32 or bfloat16).
      object_segmaps:         (B, N, L) float array (float32 or bfloat16).
      threshold: kept for API parity; the reference forward never reads it.
      normalize: matches the PyTorch module flag.
      use_mxu_reduction: None = auto (bf16 inputs with L % 128 == 0); set True
        on v7x to offload the row sums to the MXU even for float32 inputs.
    Returns:
      (B, N) float32 array.
    """
    del threshold  # Unused by the reference forward (verified against the spec).
    assert object_token_attn_prob.shape == object_segmaps.shape
    B, N, L = object_token_attn_prob.shape
    rows = B * N

    prob2d = object_token_attn_prob.reshape(rows, L)
    seg2d = object_segmaps.reshape(rows, L)

    dtype = jnp.dtype(prob2d.dtype)
    itemsize = dtype.itemsize
    if use_mxu_reduction is None:
        use_mxu_reduction = (dtype == jnp.bfloat16)
    use_mxu = bool(use_mxu_reduction) and (L % 128 == 0) and L >= 128

    # Generation-aware VMEM budget: cap total usage at 48 MiB (safe on v7x's
    # 64 MiB physical VMEM, raises the scoped default on v5e/v6e).
    phys_vmem = _physical_vmem_bytes()
    cap_total = max(min(48 << 20, (phys_vmem * 3) // 4), 16 << 20)
    slack = 6 << 20
    ones_bytes = 2 * L * 128 * itemsize if use_mxu else 0
    # Per-row VMEM: 2 inputs x 2 pipeline buffers, up to ~3 full-width f32
    # temporaries (astype copies / prob*seg product), MXU result tiles.
    per_row = 4 * L * itemsize + 3 * L * 4 + (2 * 128 * 4 if use_mxu else 0)
    budget = max(cap_total - slack - ones_bytes, 1 << 20)
    tr = _choose_row_tile(rows, per_row, budget)

    # v7x has two TensorCores: give a single-step "parallel" grid a second
    # step when there is enough work to split (harmless on v5e/v6e).
    if pl.cdiv(rows, tr) == 1 and tr > 128:
        tr_split = (((rows + 1) // 2 + 127) // 128) * 128
        if tr_split < rows:
            tr = tr_split
    num_tiles = pl.cdiv(rows, tr)

    kernel = functools.partial(_balanced_l1_kernel, normalize=normalize,
                               num_l=float(L), use_mxu=use_mxu)

    in_specs = [
        pl.BlockSpec((tr, L), lambda r: (r, 0)),
        pl.BlockSpec((tr, L), lambda r: (r, 0)),
    ]
    args = [prob2d, seg2d]
    if use_mxu:
        # Resident (same block every step) ones matrix for the MXU row sums.
        in_specs.append(pl.BlockSpec((L, 128), lambda r: (0, 0)))
        args.append(jnp.ones((L, 128), dtype))

    out = pl.pallas_call(
        kernel,
        out_shape=jax.ShapeDtypeStruct((1, rows), jnp.float32),
        grid=(num_tiles,),
        in_specs=in_specs,
        out_specs=pl.BlockSpec((1, tr), lambda r: (0, r)),
        compiler_params=pltpu.CompilerParams(
            dimension_semantics=("parallel",),
            vmem_limit_bytes=int(cap_total),
        ),
    )(*args)

    return out.reshape(B, N)


def _reference(prob, seg, normalize=False):
    # Direct transcription of the PyTorch forward (computed in float32).
    prob = prob.astype(jnp.float32)
    seg = seg.astype(jnp.float32)
    if normalize:
        prob = prob / (jnp.max(prob, axis=2, keepdims=True) + 1e-05)
    bg = 1.0 - seg
    bg_sum = bg.sum(axis=2) + 1e-05
    obj_sum = seg.sum(axis=2) + 1e-05
    return (prob * bg).sum(axis=2) / bg_sum - (prob * seg).sum(axis=2) / obj_sum


if __name__ == "__main__":
    # B = 2 batch, N = 8 object tokens, L = 256 flattened spatial positions.
    B, N, L = 2, 8, 256
    key = jax.random.PRNGKey(0)
    k1, k2, k3, k4 = jax.random.split(key, 4)

    logits = jax.random.normal(k1, (B, N, L), dtype=jnp.float32)
    prob = jax.nn.softmax(logits, axis=-1)               # attention probs over L
    seg = (jax.random.uniform(k2, (B, N, L)) > 0.7).astype(jnp.float32)

    ok = True

    # float32, both normalize modes (VPU reduction path).
    for normalize in (False, True):
        out = jax.block_until_ready(
            balanced_l1_loss(prob, seg, normalize=normalize))
        ref = _reference(prob, seg, normalize=normalize)
        ok &= out.shape == (B, N)
        ok &= bool(jnp.allclose(out, ref, atol=1e-5, rtol=1e-4))

    # Ragged row count (B*N not a multiple of the tile) + multi-step grid.
    B2, N2 = 2, 150
    logits2 = jax.random.normal(k3, (B2, N2, L), dtype=jnp.float32)
    prob2 = jax.nn.softmax(logits2, axis=-1)
    seg2 = (jax.random.uniform(k4, (B2, N2, L)) > 0.6).astype(jnp.float32)
    out2 = jax.block_until_ready(balanced_l1_loss(prob2, seg2))
    ok &= bool(jnp.allclose(out2, _reference(prob2, seg2), atol=1e-5, rtol=1e-4))

    # bfloat16 inputs exercise the MXU row-sum path (auto-enabled for bf16).
    prob_bf = prob.astype(jnp.bfloat16)
    seg_bf = seg.astype(jnp.bfloat16)
    out_bf = jax.block_until_ready(
        balanced_l1_loss(prob_bf, seg_bf, normalize=True))
    ref_bf = _reference(prob_bf, seg_bf, normalize=True)
    ok &= bool(jnp.allclose(out_bf, ref_bf, atol=1e-4, rtol=1e-3))

    assert ok
    print("KERNEL_OK")
</pallas_src>

<mosaic_0001>
module attributes {stable_mosaic.version = 11 : i64} {
  func.func @_balanced_l1_kernel(%arg0: i32, %arg1: memref<16x256xf32, #tpu.memory_space<vmem>>, %arg2: memref<16x256xf32, #tpu.memory_space<vmem>>, %arg3: memref<1x16xf32, #tpu.memory_space<vmem>>) attributes {dimension_semantics = [#tpu.dimension_semantics<parallel>], iteration_bounds = array<i64: 1>, scalar_prefetch = 0 : i64, scratch_operands = 0 : i64, tpu.core_type = #tpu.core_type<tc>, window_params = [{transform_indices = @transform_0, window_bounds = array<i64: 16, 256>}, {transform_indices = @transform_1, window_bounds = array<i64: 16, 256>}, {transform_indices = @transform_2, window_bounds = array<i64: 1, 16>}]} {
    %c0 = arith.constant 0 : index
    %c0_0 = arith.constant 0 : index
    %0 = vector.load %arg1[%c0, %c0_0] : memref<16x256xf32, #tpu.memory_space<vmem>>, vector<16x256xf32>
    %c0_1 = arith.constant 0 : index
    %c0_2 = arith.constant 0 : index
    %1 = vector.load %arg2[%c0_1, %c0_2] : memref<16x256xf32, #tpu.memory_space<vmem>>, vector<16x256xf32>
    %cst = arith.constant dense<0.000000e+00> : vector<16xf32>
    %2 = vector.multi_reduction <add>, %0, %cst [1] : vector<16x256xf32> to vector<16xf32>
    %cst_3 = arith.constant dense<0.000000e+00> : vector<16xf32>
    %3 = vector.multi_reduction <add>, %1, %cst_3 [1] : vector<16x256xf32> to vector<16xf32>
    %4 = arith.mulf %0, %1 : vector<16x256xf32>
    %cst_4 = arith.constant dense<0.000000e+00> : vector<16xf32>
    %5 = vector.multi_reduction <add>, %4, %cst_4 [1] : vector<16x256xf32> to vector<16xf32>
    %6 = arith.subf %2, %5 : vector<16xf32>
    %cst_5 = arith.constant 2.560000e+02 : f32
    %7 = vector.broadcast %cst_5 : f32 to vector<16xf32>
    %8 = arith.subf %7, %3 : vector<16xf32>
    %cst_6 = arith.constant 9.99999974E-6 : f32
    %9 = vector.broadcast %cst_6 : f32 to vector<16xf32>
    %10 = arith.addf %8, %9 : vector<16xf32>
    %cst_7 = arith.constant 9.99999974E-6 : f32
    %11 = vector.broadcast %cst_7 : f32 to vector<16xf32>
    %12 = arith.addf %3, %11 : vector<16xf32>
    %13 = arith.divf %6, %10 : vector<16xf32>
    %14 = arith.divf %5, %12 : vector<16xf32>
    %15 = arith.subf %13, %14 : vector<16xf32>
    %16 = vector.shape_cast %15 : vector<16xf32> to vector<1x16xf32>
    %c0_8 = arith.constant 0 : index
    %c0_9 = arith.constant 0 : index
    %17 = vector.load %arg3[%c0_8, %c0_9] : memref<1x16xf32, #tpu.memory_space<vmem>>, vector<1x16xf32>
    tpu.vector_store %arg3[%c0_8, %c0_9], %16 {strides = array<i32>} : memref<1x16xf32, #tpu.memory_space<vmem>>, vector<1x16xf32>,
    return
  }
  func.func @transform_0(%arg0: i32) -> (i32, i32) {
    %c0_i32 = arith.constant 0 : i32
    %c0_i32_0 = arith.constant 0 : i32
    return %arg0, %c0_i32 : i32, i32
  }
  func.func @transform_1(%arg0: i32) -> (i32, i32) {
    %c0_i32 = arith.constant 0 : i32
    %c0_i32_0 = arith.constant 0 : i32
    return %arg0, %c0_i32 : i32, i32
  }
  func.func @transform_2(%arg0: i32) -> (i32, i32) {
    %c0_i32 = arith.constant 0 : i32
    %c0_i32_0 = arith.constant 0 : i32
    return %c0_i32, %arg0 : i32, i32
  }
}

</mosaic_0001>

<llo_original>
// kernel: tpu_custom_call.1
$region0: #{tpu_custom_call.1}
  #allocation0 [shape = 'u32[]', space=smem, size = 0x4, offset = 0x4, fixed_abs, tag = 'smem constant byte address 0x4 - core index']
  #allocation1 [shape = 'u32[144,128]{1,0:T(1,128)}', space=vmem, size = 0x12000, scoped, tag = 'internal scratch']
  %s0 = inlined_call_operand.hbm [shape: f32[16,256], index: 0, kind: input, shape index: {}]
  %s1 = inlined_call_operand.hbm [shape: f32[16,256], index: 1, kind: input, shape index: {}]
  %s2 = inlined_call_operand.hbm [shape: f32[1,16], index: 2, kind: output, shape index: {}]
  %s3 = sld [smem:[#allocation0]]
  $region26: #{tpu_custom_call.1} parent=0
    _
  %s5 = ssub.s32 1, %s3
  %s6 = scalar_select 0, %s5, %s3
  $region1: #{tpu_custom_call.1} parent=0
    #allocation2 [shape = 'u8[16384]{0}', space=vmem, size = 0x4000, scoped, tag = 'input window, operand 0, single buffered']
    #allocation3 [shape = 's32[1]{0}', space=sflag, size = 0x4, scoped, tag = 'scoped memory for tpu_custom_call.1']
    #allocation4 [shape = 's32[1]{0}', space=sflag, size = 0x4, scoped, tag = 'scoped memory for tpu_custom_call.1']
    #allocation5 [shape = 'u8[16384]{0}', space=vmem, size = 0x4000, scoped, tag = 'input window, operand 1, single buffered']
    #allocation6 [shape = 's32[1]{0}', space=sflag, size = 0x4, scoped, tag = 'scoped memory for tpu_custom_call.1']
    #allocation7 [shape = 'u8[512]{0}', space=vmem, size = 0x400, scoped, tag = 'output window, operand 0, single buffered']
    %7 = vsyncpa [#allocation3], 0
    %8 = vsyncpa [#allocation6], 0
    %9 = vsyncpa [#allocation4], 0
    // Predicated region
    $region2: #{tpu_custom_call.1} parent=1 // pred_check
      _
    $region3: #{tpu_custom_call.1} parent=1 // pred_check_branch
      %11 = sbr.rel (0) target = $region5
    $region4: #{tpu_custom_call.1} parent=1 // pred_region
      %s13 = ssub.s32 512, 512
      %14 = vsyncadd [#allocation3], %s13
      %s15 = sshll.u32 [#allocation2], 4
      %s16 = int_to_ptr.vmem [resolvable:$true] %s15
      %21 = dma.hbm_to_vmem [thread:$0]  %s0, 512, %s16, [#allocation3], 256, 256, 16
    $region5: #{tpu_custom_call.1} parent=1 // pred_fallthru
      _
    // Predicated region
    $region6: #{tpu_custom_call.1} parent=1 // pred_check
      _
    $region7: #{tpu_custom_call.1} parent=1 // pred_check_branch
      %23 = sbr.rel (0) target = $region9
    $region8: #{tpu_custom_call.1} parent=1 // pred_region
      %s25 = ssub.s32 512, 512
      %26 = vsyncadd [#allocation6], %s25
      %s27 = sshll.u32 [#allocation5], 4
      %s28 = int_to_ptr.vmem [resolvable:$true] %s27
      %33 = dma.hbm_to_vmem [thread:$0]  %s1, 512, %s28, [#allocation6], 256, 256, 16
    $region9: #{tpu_custom_call.1} parent=1 // pred_fallthru
      _
    // Predicated region
    $region10: #{tpu_custom_call.1} parent=1 // pred_check
      _
    $region11: #{tpu_custom_call.1} parent=1 // pred_check_branch
      %35 = sbr.rel (0) target = $region13
    $region12: #{tpu_custom_call.1} parent=1 // pred_region
      %36 = dma.done [#allocation3], 512
    $region13: #{tpu_custom_call.1} parent=1 // pred_fallthru
      _
    // Predicated region
    $region14: #{tpu_custom_call.1} parent=1 // pred_check
      _
    $region15: #{tpu_custom_call.1} parent=1 // pred_check_branch
      %38 = sbr.rel (0) target = $region17
    $region16: #{tpu_custom_call.1} parent=1 // pred_region
      %39 = dma.done [#allocation6], 512
    $region17: #{tpu_custom_call.1} parent=1 // pred_fallthru
      _
    %v40 = vld [vmem:[#allocation2] sm:$0xff]
    %v41 = vld [vmem:[#allocation2 + $0x8] sm:$0xff]
    %v42 = vld [vmem:[#allocation2 + $0x10] sm:$0xff]
    %v43 = vld [vmem:[#allocation2 + $0x18] sm:$0xff]
    %v44 = vld [vmem:[#allocation5] sm:$0xff]
    %v45 = vld [vmem:[#allocation5 + $0x8] sm:$0xff]
    %v46 = vld [vmem:[#allocation5 + $0x10] sm:$0xff]
    %v47 = vld [vmem:[#allocation5 + $0x18] sm:$0xff]
    %v48 = vadd.f32 %v40, %v41
    %49 = vadd.xlane.f32.xlu0 %v48
    %v50 = vpop.xlane.xlu0 %49
    %v51 = vadd.f32 %v42, %v43
    %52 = vadd.xlane.f32.xlu0 %v51
    %v53 = vpop.xlane.xlu0 %52
    %v54 = vadd.f32 %v44, %v45
    %55 = vadd.xlane.f32.xlu0 %v54
    %v56 = vpop.xlane.xlu0 %55
    %v57 = vadd.f32 %v46, %v47
    %58 = vadd.xlane.f32.xlu0 %v57
    %v59 = vpop.xlane.xlu0 %58
    %v60 = vmul.f32 %v40, %v44
    %v61 = vmul.f32 %v41, %v45
    %v62 = vmul.f32 %v42, %v46
    %v63 = vmul.f32 %v43, %v47
    %v64 = vadd.f32 %v60, %v61
    %65 = vadd.xlane.f32.xlu0 %v64
    %v66 = vpop.xlane.xlu0 %65
    %v67 = vadd.f32 %v62, %v63
    %68 = vadd.xlane.f32.xlu0 %v67
    %v69 = vpop.xlane.xlu0 %68
    %v70 = vsub.f32 %v50, %v66
    %v71 = vsub.f32 %v53, %v69
    %v72 = vsub.f32 256.0, %v56
    %v73 = vsub.f32 256.0, %v59
    %v74 = vadd.f32 %v72, 1e-05
    %v75 = vadd.f32 %v73, 1e-05
    %v76 = vadd.f32 %v56, 1e-05
    %v77 = vadd.f32 %v59, 1e-05
    %v78 = vrcp.pop %v74
    %v79 = vmul.f32 %v70, %v78
    %v80 = vrcp.pop %v75
    %v81 = vmul.f32 %v71, %v80
    %v82 = vrcp.pop %v76
    %v83 = vmul.f32 %v66, %v82
    %v84 = vrcp.pop %v77
    %v85 = vmul.f32 %v69, %v84
    %v86 = vsub.f32 %v79, %v83
    %v87 = vsub.f32 %v81, %v85
    %v90 = vlaneseq
    %v91 = vand.u32 %v90, 127
    %v92 = vlaneseq
    %v93 = vshrl.u32 %v92, 7
    %v94 = vsub.s32 %v91, %v93
    %v95 = vrot.slane %v86, %v94
    %v96 = vadd.s32 %v91, 4294967288
    %v97 = vlaneseq
    %v98 = vshrl.u32 %v97, 7
    %v99 = vsub.s32 %v96, %v98
    %v100 = vrot.slane %v87, %v99
    %vm101 = vcmask 130112
    %v102 = vsel %vm101, %v100, %v95
    %vm104 = vcmask 122880
    %105 = vst.msk [vmem:[#allocation7] sm:$0x1] %vm104, %v102
    // Predicated region
    $region18: #{tpu_custom_call.1} parent=1 // pred_check
      _
    $region19: #{tpu_custom_call.1} parent=1 // pred_check_branch
      %107 = sbr.rel (0) target = $region21
    $region20: #{tpu_custom_call.1} parent=1 // pred_region
      %s109 = ssub.s32 16, 16
      %110 = vsyncadd [#allocation4], %s109
      %s112 = sshll.u32 [#allocation7], 4
      %s113 = int_to_ptr.vmem [resolvable:$true] %s112
      %115 = dma.vmem_to_hbm [thread:$0]  %s113, 16, %s2, [#allocation4]
    $region21: #{tpu_custom_call.1} parent=1 // pred_fallthru
      _
    // Predicated region
    $region22: #{tpu_custom_call.1} parent=1 // pred_check
      _
    $region23: #{tpu_custom_call.1} parent=1 // pred_check_branch
      %117 = sbr.rel (0) target = $region25
    $region24: #{tpu_custom_call.1} parent=1 // pred_region
      %118 = dma.done [#allocation4], 16
    $region25: #{tpu_custom_call.1} parent=1 // pred_fallthru
      _
    %119 = vsyncpa [#allocation3], 1
    %120 = vsyncpa [#allocation6], 1
    %121 = vsyncpa [#allocation4], 1

</llo_original>
